<compile_context>
chip_gen: v7x
topology: tpu7x:2x2x1
jax: 0.10.0
libtpu: 0.0.40
codegen_flags: <defaults>
</compile_context>

<pallas_src>
import functools

import jax
import jax.numpy as jnp
from jax import lax
from jax.experimental import pallas as pl
from jax.experimental.pallas import tpu as pltpu

_LANES = 128
_MAX_BLOCK_ROWS = 1024  # (1024, 128) f32 block = 512 KiB; 2 inputs x 2 bufs = 2 MiB VMEM


def _sse_block_kernel(x_ref, y_ref, o_ref, *, total_rows, block_rows):
    """Per-grid-step partial sum of squared error.

    x_ref, y_ref: (block_rows, 128) input tiles (original dtype, upcast here).
    o_ref:        (1, 8, 128) float32 lane/sublane-resident partial sums.
    """
    d = x_ref[...].astype(jnp.float32) - y_ref[...].astype(jnp.float32)
    sq = d * d

    if total_rows % block_rows != 0:
        # Ragged last block: rows >= total_rows hold undefined data -> mask.
        row0 = pl.program_id(0) * block_rows
        rid = row0 + lax.broadcasted_iota(jnp.int32, (block_rows, _LANES), 0)
        sq = jnp.where(rid < total_rows, sq, 0.0)

    # Reduce only along the vreg-granular leading axis: pure VPU adds into a
    # single (8, 128) vreg of partial sums. No per-step cross-lane XLU reduce,
    # no masked (1,1) scalar store.
    o_ref[0] = jnp.sum(sq.reshape(block_rows // 8, 8, _LANES), axis=0)


def _bulk_sse(x2, y2, block_rows):
    """Sum((x2 - y2)^2) over a (rows, 128) slab via the Pallas kernel."""
    rows = x2.shape[0]
    nblocks = pl.cdiv(rows, block_rows)
    kernel = functools.partial(
        _sse_block_kernel, total_rows=rows, block_rows=block_rows
    )
    partials = pl.pallas_call(
        kernel,
        out_shape=jax.ShapeDtypeStruct((nblocks, 8, _LANES), jnp.float32),
        grid=(nblocks,),
        in_specs=[
            pl.BlockSpec((block_rows, _LANES), lambda i: (i, 0)),
            pl.BlockSpec((block_rows, _LANES), lambda i: (i, 0)),
        ],
        out_specs=pl.BlockSpec((1, 8, _LANES), lambda i: (i, 0, 0)),
        compiler_params=pltpu.CompilerParams(
            dimension_semantics=("parallel",),  # distinct output blocks -> megacore OK
        ),
    )(x2, y2)
    # Tiny (nblocks, 8, 128) cross-lane reduce done once, outside the kernel.
    return jnp.sum(partials)


@jax.jit
def _sum_squared_error(x, y):
    """Sum of squared differences over all elements (f32 accumulation)."""
    xr = jnp.ravel(x)
    yr = jnp.ravel(y)
    n = xr.shape[0]

    # Sublane alignment per dtype width (f32: 8 rows, bf16: 16, int8/fp8: 32).
    itemsize = min(jnp.dtype(x.dtype).itemsize, jnp.dtype(y.dtype).itemsize)
    sub = max(8, 32 // max(1, itemsize))
    chunk = sub * _LANES
    n_bulk = (n // chunk) * chunk

    sse = jnp.zeros((), jnp.float32)

    if n_bulk > 0:
        xb = xr if n_bulk == n else xr[:n_bulk]
        yb = yr if n_bulk == n else yr[:n_bulk]
        rows = n_bulk // _LANES
        block_rows = min(_MAX_BLOCK_ROWS, rows)
        sse = sse + _bulk_sse(
            xb.reshape(rows, _LANES), yb.reshape(rows, _LANES), block_rows
        )

    if n_bulk < n:
        # Ragged tail (< sub*128 elements): negligible work, plain JAX; avoids
        # materializing a padded copy of the whole tensor in HBM.
        xt = xr[n_bulk:].astype(jnp.float32)
        yt = yr[n_bulk:].astype(jnp.float32)
        sse = sse + jnp.sum((xt - yt) * (xt - yt))

    return sse


def feature_mse_loss(inputs, weight=1.0):
    """JAX/Pallas equivalent of FeatureMSELoss.forward.

    inputs: dict with 'feats_recon' (dict of arrays), optionally
            'gt_block_feats' (dict of arrays with matching keys/shapes),
            and 'image' (only used for the zero-loss fallback path).
    Note: matching the PyTorch module, `weight` is stored but not applied.
    """
    feats_recon = inputs["feats_recon"]
    if "gt_block_feats" in inputs:
        gt_block_feats = inputs["gt_block_feats"]
        total = jnp.zeros((), jnp.float32)
        for key in feats_recon:
            x = feats_recon[key]
            y = gt_block_feats[key]
            assert x.shape == y.shape, (key, x.shape, y.shape)
            total = total + _sum_squared_error(x, y) / jnp.float32(x.size)
        return total
    else:
        return jnp.zeros((), dtype=jnp.float32)


if __name__ == "__main__":
    key = jax.random.PRNGKey(0)
    ks = jax.random.split(key, 8)

    # NCHW feature maps, multi-level feature dict.  Shapes chosen to exercise:
    #  - single full block (block1, block2)
    #  - kernel bulk + plain-JAX ragged tail (block3: 1536 = 1024 + 512 elems)
    #  - multi-block grid with masked ragged last block (block4: 135168 elems)
    shapes = {
        "block1": (2, 4, 16, 16),
        "block2": (2, 8, 8, 8),
        "block3": (2, 3, 16, 16),
        "block4": (2, 66, 32, 32),
    }
    feats_recon = {
        k: jax.random.normal(ks[i], s, dtype=jnp.float32)
        for i, (k, s) in enumerate(shapes.items())
    }
    gt_block_feats = {
        k: jax.random.normal(ks[i + 4], s, dtype=jnp.float32)
        for i, (k, s) in enumerate(shapes.items())
    }
    inputs = {
        "feats_recon": feats_recon,
        "gt_block_feats": gt_block_feats,
        "image": jnp.zeros((2, 3, 16, 16), dtype=jnp.float32),
    }

    # weight is a constructor arg in the PyTorch module; stored, unused in fwd.
    loss = jax.block_until_ready(feature_mse_loss(inputs, weight=1.0))

    # Reference: MSELoss (reduction='mean') summed over keys, in plain JAX.
    ref = sum(
        jnp.mean((feats_recon[k] - gt_block_feats[k]) ** 2) for k in shapes
    )
    assert jnp.allclose(loss, ref, rtol=1e-5, atol=1e-5), (float(loss), float(ref))

    # Fallback path: no gt_block_feats -> 0.0
    zero = jax.block_until_ready(
        feature_mse_loss({"feats_recon": feats_recon, "image": inputs["image"]})
    )
    assert float(zero) == 0.0

    print("KERNEL_OK")
</pallas_src>

<mosaic_0001>
module attributes {stable_mosaic.version = 11 : i64} {
  func.func @_sse_block_kernel(%arg0: i32, %arg1: memref<16x128xf32, #tpu.memory_space<vmem>>, %arg2: memref<16x128xf32, #tpu.memory_space<vmem>>, %arg3: memref<1x8x128xf32, #tpu.memory_space<vmem>>) attributes {dimension_semantics = [#tpu.dimension_semantics<parallel>], iteration_bounds = array<i64: 1>, scalar_prefetch = 0 : i64, scratch_operands = 0 : i64, tpu.core_type = #tpu.core_type<tc>, window_params = [{transform_indices = @transform_0, window_bounds = array<i64: 16, 128>}, {transform_indices = @transform_1, window_bounds = array<i64: 16, 128>}, {transform_indices = @transform_2, window_bounds = array<i64: 1, 8, 128>}]} {
    %c0 = arith.constant 0 : index
    %c0_0 = arith.constant 0 : index
    %0 = vector.load %arg1[%c0, %c0_0] : memref<16x128xf32, #tpu.memory_space<vmem>>, vector<16x128xf32>
    %c0_1 = arith.constant 0 : index
    %c0_2 = arith.constant 0 : index
    %1 = vector.load %arg2[%c0_1, %c0_2] : memref<16x128xf32, #tpu.memory_space<vmem>>, vector<16x128xf32>
    %2 = arith.subf %0, %1 : vector<16x128xf32>
    %3 = arith.mulf %2, %2 : vector<16x128xf32>
    %4 = vector.shape_cast %3 : vector<16x128xf32> to vector<2x8x128xf32>
    %cst = arith.constant dense<0.000000e+00> : vector<8x128xf32>
    %5 = vector.multi_reduction <add>, %4, %cst [0] : vector<2x8x128xf32> to vector<8x128xf32>
    %c0_3 = arith.constant 0 : index
    %c0_4 = arith.constant 0 : index
    %c0_5 = arith.constant 0 : index
    %6 = vector.load %arg3[%c0_3, %c0_4, %c0_5] : memref<1x8x128xf32, #tpu.memory_space<vmem>>, vector<1x8x128xf32>
    %7 = vector.shape_cast %6 : vector<1x8x128xf32> to vector<8x128xf32>
    %8 = vector.shape_cast %5 : vector<8x128xf32> to vector<1x8x128xf32>
    tpu.vector_store %arg3[%c0_3, %c0_4, %c0_5], %8 {strides = array<i32>} : memref<1x8x128xf32, #tpu.memory_space<vmem>>, vector<1x8x128xf32>,
    return
  }
  func.func @transform_0(%arg0: i32) -> (i32, i32) {
    %c0_i32 = arith.constant 0 : i32
    %c0_i32_0 = arith.constant 0 : i32
    return %arg0, %c0_i32 : i32, i32
  }
  func.func @transform_1(%arg0: i32) -> (i32, i32) {
    %c0_i32 = arith.constant 0 : i32
    %c0_i32_0 = arith.constant 0 : i32
    return %arg0, %c0_i32 : i32, i32
  }
  func.func @transform_2(%arg0: i32) -> (i32, i32, i32) {
    %c0_i32 = arith.constant 0 : i32
    %c0_i32_0 = arith.constant 0 : i32
    %c0_i32_1 = arith.constant 0 : i32
    return %arg0, %c0_i32, %c0_i32_0 : i32, i32, i32
  }
}

</mosaic_0001>

<llo_original>
// kernel: _sum_squared_error.1
$region0: #{_sum_squared_error.1}
  #allocation0 [shape = 'u32[]', space=smem, size = 0x4, offset = 0x4, fixed_abs, tag = 'smem constant byte address 0x4 - core index']
  #allocation1 [shape = 'u32[144,128]{1,0:T(1,128)}', space=vmem, size = 0x12000, scoped, tag = 'internal scratch']
  %s0 = inlined_call_operand.vmem [shape: f32[16,128], index: 0, kind: input, shape index: {}]
  %s1 = inlined_call_operand.vmem [shape: f32[16,128], index: 1, kind: input, shape index: {}]
  %s2 = inlined_call_operand.vmem [shape: f32[1,8,128], index: 2, kind: output, shape index: {}]
  %s3 = sld [smem:[#allocation0]]
  $region18: #{_sum_squared_error.1} parent=0
    _
  %s5 = ssub.s32 1, %s3
  %s6 = scalar_select 0, %s5, %s3
  // Predicated region
  $region2: #{_sum_squared_error.1} parent=0 // pred_check
    _
  $region3: #{_sum_squared_error.1} parent=0 // pred_check_branch
    %8 = sbr.rel (0) target = $region5
  $region4: #{_sum_squared_error.1} parent=0 // pred_region
    _
  $region5: #{_sum_squared_error.1} parent=0 // pred_fallthru
    _
  // Predicated region
  $region6: #{_sum_squared_error.1} parent=0 // pred_check
    _
  $region7: #{_sum_squared_error.1} parent=0 // pred_check_branch
    %10 = sbr.rel (0) target = $region9
  $region8: #{_sum_squared_error.1} parent=0 // pred_region
    _
  $region9: #{_sum_squared_error.1} parent=0 // pred_fallthru
    _
  %v11 = vld [vmem:[%s0] sm:$0xff]
  %v12 = vld [vmem:[%s0 + $0x8] sm:$0xff]
  %v13 = vld [vmem:[%s1] sm:$0xff]
  %v14 = vld [vmem:[%s1 + $0x8] sm:$0xff]
  %v15 = vsub.f32 %v11, %v13
  %v16 = vsub.f32 %v12, %v14
  %v17 = vmul.f32 %v15, %v15
  %v18 = vmul.f32 %v16, %v16
  %v19 = vadd.f32 %v17, %v18
  %20 = vst [vmem:[%s2] sm:$0xff] %v19
  // Predicated region
  $region10: #{_sum_squared_error.1} parent=0 // pred_check
    _
  $region11: #{_sum_squared_error.1} parent=0 // pred_check_branch
    %22 = sbr.rel (0) target = $region13
  $region12: #{_sum_squared_error.1} parent=0 // pred_region
    _
  $region13: #{_sum_squared_error.1} parent=0 // pred_fallthru
    _
  // Predicated region
  $region14: #{_sum_squared_error.1} parent=0 // pred_check
    _
  $region15: #{_sum_squared_error.1} parent=0 // pred_check_branch
    %24 = sbr.rel (0) target = $region17
  $region16: #{_sum_squared_error.1} parent=0 // pred_region
    _
  $region17: #{_sum_squared_error.1} parent=0 // pred_fallthru
    _

</llo_original>
